<compile_context>
chip_gen: v7x
topology: tpu7x:2x2x1
jax: 0.10.0
libtpu: 0.0.40
codegen_flags: <defaults>
</compile_context>

<pallas_src>
import functools

import jax
import jax.numpy as jnp
from jax import lax
from jax.experimental import pallas as pl
from jax.experimental.pallas import tpu as pltpu

GN_GROUPS = 32
GN_EPS = 1e-5


def _infer_vmem_limit():
    """Scoped VMEM limit: most of physical VMEM minus headroom for compiler scratch/spills.
    v5e/v6e (128 MiB) -> 112 MiB; v7x (64 MiB per TC) -> 48 MiB."""
    try:
        cap = int(pltpu.get_tpu_info().vmem_capacity_bytes)
    except Exception:
        cap = 64 << 20  # conservative: assume the smallest (v7x per-core) VMEM
    return max(48 << 20, min(cap - (16 << 20), 112 << 20))


_VMEM_LIMIT = _infer_vmem_limit()
_ATTN_TILE_CAP = 1024 if _VMEM_LIMIT >= (96 << 20) else 512


def _pick_tile(n, cap):
    """Largest lane tile <= cap that divides n and is a multiple of 128 (or n itself if small)."""
    if n <= cap:
        return n
    for t in range(cap, 127, -128):
        if n % t == 0:
            return t
    # TODO(synk): for large T not divisible by 128, pad T to a multiple of 128 in the wrapper and
    # mask the padded kv columns in-kernel instead of falling back to an untiled kernel.
    return n


# ----------------------- Kernel 1: GroupNorm statistics (T-tiled reduction) ----------------------- #
def _gn_stats_kernel(h_ref, mt_ref, mean_ref, inv_ref, sum_scr, sq_scr, *, total_t, cpg):
    t = pl.program_id(1)

    @pl.when(t == 0)
    def _():
        sum_scr[...] = jnp.zeros_like(sum_scr)
        sq_scr[...] = jnp.zeros_like(sq_scr)

    h = h_ref[0].astype(jnp.float32)                           # (C, Tt)
    # Reduce over T on the MXU (ones-matmul) instead of a cross-lane XLU reduction.
    ones = jnp.ones((h.shape[1], 1), jnp.float32)
    sum_scr[...] += jnp.dot(h, ones, preferred_element_type=jnp.float32)        # (C, 1)
    sq_scr[...] += jnp.dot(h * h, ones, preferred_element_type=jnp.float32)     # (C, 1)

    @pl.when(t == pl.num_programs(1) - 1)
    def _():
        mt = mt_ref[...].astype(jnp.float32)                   # (C, G) group membership
        cnt = jnp.float32(cpg * total_t)
        g_sum = lax.dot_general(mt, sum_scr[...], (((0,), (0,)), ((), ())),
                                preferred_element_type=jnp.float32)             # (G, 1)
        g_sq = lax.dot_general(mt, sq_scr[...], (((0,), (0,)), ((), ())),
                               preferred_element_type=jnp.float32)              # (G, 1)
        mean_g = g_sum / cnt
        var_g = jnp.maximum(g_sq / cnt - mean_g * mean_g, 0.0)  # one-pass formula guard
        inv_g = lax.rsqrt(var_g + GN_EPS)
        # Broadcast per-group stats back to per-channel via the membership matrix (MXU).
        mean_ref[0] = jnp.dot(mt, mean_g, preferred_element_type=jnp.float32)   # (C, 1)
        inv_ref[0] = jnp.dot(mt, inv_g, preferred_element_type=jnp.float32)     # (C, 1)


def gn_stats(h, mt):
    B, C, T = h.shape
    G = mt.shape[1]
    tt = _pick_tile(T, 512)
    kernel = functools.partial(_gn_stats_kernel, total_t=T, cpg=C // G)
    stat_sds = jax.ShapeDtypeStruct((B, C, 1), jnp.float32)
    return pl.pallas_call(
        kernel,
        out_shape=(stat_sds, stat_sds),
        grid_spec=pltpu.PrefetchScalarGridSpec(
            num_scalar_prefetch=0,
            grid=(B, T // tt),
            in_specs=[
                pl.BlockSpec((1, C, tt), lambda b, t: (b, 0, t)),
                pl.BlockSpec((C, G), lambda b, t: (0, 0)),
            ],
            out_specs=[
                pl.BlockSpec((1, C, 1), lambda b, t: (b, 0, 0)),
                pl.BlockSpec((1, C, 1), lambda b, t: (b, 0, 0)),
            ],
            scratch_shapes=[pltpu.VMEM((C, 1), jnp.float32),
                            pltpu.VMEM((C, 1), jnp.float32)],
        ),
        compiler_params=pltpu.CompilerParams(
            dimension_semantics=("parallel", "arbitrary"),
            vmem_limit_bytes=_VMEM_LIMIT),
    )(h, mt)


# ----------------------- Kernel 2: GroupNorm apply + QKV 1x1 conv (T-tiled) ----------------------- #
def _gn_apply_qkv_kernel(h_ref, mean_ref, inv_ref, gamma_ref, beta_ref,
                         w_ref, b_ref, q_ref, k_ref, v_ref):
    # Normalization arithmetic in f32; MXU operands in bf16, accumulation in f32.
    h = h_ref[0].astype(jnp.float32)                                            # (C, Tt)
    hn = (h - mean_ref[0]) * inv_ref[0] * gamma_ref[...] + beta_ref[...]
    qkv = jnp.dot(w_ref[...], hn.astype(jnp.bfloat16),
                  preferred_element_type=jnp.float32) + b_ref[...]              # (3C, Tt) f32
    C = h.shape[0]
    q_ref[0] = qkv[:C].astype(q_ref.dtype)
    k_ref[0] = qkv[C:2 * C].astype(k_ref.dtype)
    v_ref[0] = qkv[2 * C:].astype(v_ref.dtype)


def gn_apply_qkv(h, mean, inv, gamma, beta, w_all, b_all):
    B, C, T = h.shape
    tt = _pick_tile(T, 512)
    # q/k/v are emitted directly in bf16 (native MXU dtype for the attention matmuls,
    # and half the HBM traffic for the attention kernel's inputs).
    out_sds = jax.ShapeDtypeStruct((B, C, T), jnp.bfloat16)
    bct_in_spec = pl.BlockSpec((1, C, tt), lambda b, t: (b, 0, t))
    stat_spec = pl.BlockSpec((1, C, 1), lambda b, t: (b, 0, 0))
    return pl.pallas_call(
        _gn_apply_qkv_kernel,
        out_shape=(out_sds, out_sds, out_sds),
        grid_spec=pltpu.PrefetchScalarGridSpec(
            num_scalar_prefetch=0,
            grid=(B, T // tt),
            in_specs=[
                bct_in_spec,
                stat_spec, stat_spec,
                pl.BlockSpec((C, 1), lambda b, t: (0, 0)),
                pl.BlockSpec((C, 1), lambda b, t: (0, 0)),
                pl.BlockSpec((3 * C, C), lambda b, t: (0, 0)),
                pl.BlockSpec((3 * C, 1), lambda b, t: (0, 0)),
            ],
            out_specs=[bct_in_spec, bct_in_spec, bct_in_spec],
        ),
        compiler_params=pltpu.CompilerParams(
            dimension_semantics=("parallel", "parallel"),
            vmem_limit_bytes=_VMEM_LIMIT),
    )(h, mean, inv, gamma, beta, w_all, b_all)


# --------------- Kernel 3: flash attention + proj_out 1x1 conv + residual (fused) --------------- #
def _attn_proj_res_kernel(q_ref, k_ref, v_ref, wp_ref, bp_ref, x_ref, o_ref,
                          m_scr, l_scr, acc_h, heads_scr):
    h_idx = pl.program_id(2)
    kv = pl.program_id(3)
    nh = pl.num_programs(2)
    nkv = pl.num_programs(3)
    ch = acc_h.shape[0]

    @pl.when(kv == 0)
    def _():
        m_scr[...] = jnp.full_like(m_scr, -jnp.inf)
        l_scr[...] = jnp.zeros_like(l_scr)
        acc_h[...] = jnp.zeros_like(acc_h)

    # Scores laid out (Tkv, Tq): softmax stats are (1, Tq) so they broadcast against the
    # (ch, Tq) accumulator with no transposes.  q/k are bf16 (native MXU dtype), f32 accumulate.
    # The ch**-0.25 scale is pre-folded into the q/k rows of the QKV weights.
    s = lax.dot_general(k_ref[0], q_ref[0], (((0,), (0,)), ((), ())),
                        preferred_element_type=jnp.float32)                     # (Tkv, Tq) f32
    m_new = jnp.maximum(m_scr[...], jnp.max(s, axis=0, keepdims=True))          # (1, Tq)
    alpha = jnp.exp(m_scr[...] - m_new)
    p = jnp.exp(s - m_new)                                                      # f32 exp (v5e-safe)
    p_bf = p.astype(jnp.bfloat16)                                               # MXU operand dtype
    # Softmax denominator on the MXU (ones-row matmul) instead of a sublane reduction.
    ones_row = jnp.ones((1, p_bf.shape[0]), jnp.bfloat16)
    l_scr[...] = l_scr[...] * alpha + jnp.dot(ones_row, p_bf,
                                              preferred_element_type=jnp.float32)
    acc_h[...] = acc_h[...] * alpha + jnp.dot(v_ref[0], p_bf,
                                              preferred_element_type=jnp.float32)   # (ch, Tq)
    m_scr[...] = m_new

    @pl.when(kv == nkv - 1)
    def _():
        # Finalize this head and write it into its channel rows of the concat-heads scratch.
        off = pl.multiple_of(h_idx * ch, ch)
        heads_scr[pl.ds(off, ch), :] = acc_h[...] * pl.reciprocal(l_scr[...], approx=True)

    @pl.when(jnp.logical_and(h_idx == nh - 1, kv == nkv - 1))
    def _():
        # One full-depth (C,C) x (C,Tq) proj matmul + bias + residual (no per-head tiny matmuls).
        proj = jnp.dot(wp_ref[...], heads_scr[...].astype(jnp.bfloat16),
                       preferred_element_type=jnp.float32)                      # (C, Tq)
        o_ref[0] = (proj + bp_ref[...] + x_ref[0].astype(jnp.float32)).astype(o_ref.dtype)


def attn_proj_residual(q, k, v, x, w_proj, b_proj, num_heads, *, tile_cap=_ATTN_TILE_CAP):
    B, C, T = q.shape
    ch = C // num_heads
    tq = _pick_tile(T, tile_cap)
    tkv = _pick_tile(T, tile_cap)
    # v7x has 2 TensorCores sharded over the "parallel" grid axes: keep >= 2 parallel points.
    while B * (T // tq) < 2 and tq % 256 == 0:
        tq //= 2
    head_spec_q = pl.BlockSpec((1, ch, tq), lambda b, qi, h, kv: (b, h, qi))
    head_spec_kv = pl.BlockSpec((1, ch, tkv), lambda b, qi, h, kv: (b, h, kv))
    out_spec = pl.BlockSpec((1, C, tq), lambda b, qi, h, kv: (b, 0, qi))
    return pl.pallas_call(
        _attn_proj_res_kernel,
        out_shape=jax.ShapeDtypeStruct((B, C, T), x.dtype),
        grid_spec=pltpu.PrefetchScalarGridSpec(
            num_scalar_prefetch=0,
            grid=(B, T // tq, num_heads, T // tkv),
            in_specs=[
                head_spec_q,                                            # q  (bf16)
                head_spec_kv,                                           # k  (bf16)
                head_spec_kv,                                           # v  (bf16)
                pl.BlockSpec((C, C), lambda b, qi, h, kv: (0, 0)),      # w_proj (bf16, full)
                pl.BlockSpec((C, 1), lambda b, qi, h, kv: (0, 0)),      # proj bias (f32)
                out_spec,                                               # residual x
            ],
            out_specs=out_spec,
            scratch_shapes=[
                pltpu.VMEM((1, tq), jnp.float32),    # running max
                pltpu.VMEM((1, tq), jnp.float32),    # running sum
                pltpu.VMEM((ch, tq), jnp.float32),   # per-head accumulator
                pltpu.VMEM((C, tq), jnp.float32),    # concat-heads buffer
            ],
        ),
        compiler_params=pltpu.CompilerParams(
            dimension_semantics=("parallel", "parallel", "arbitrary", "arbitrary"),
            vmem_limit_bytes=_VMEM_LIMIT),
    )(q, k, v, w_proj, b_proj, x)


# ----------------------------------- Full module forward ----------------------------------- #
def multi_head_attn_block(x, params, num_heads):
    """x: [B, C, H, W] (NCHW).  Returns the same shape."""
    B, C, H, W = x.shape
    assert C % GN_GROUPS == 0 and C % num_heads == 0
    T = H * W
    h = x.reshape(B, C, T)

    # Group-membership matrix (C, G), built once in the wrapper (hoisted out of the kernels).
    grp = jnp.arange(C, dtype=jnp.int32) // (C // GN_GROUPS)
    mt = (grp[:, None] == jnp.arange(GN_GROUPS, dtype=jnp.int32)[None, :]).astype(jnp.float32)

    # Fold the ch**-0.25 attention scale into the q/k rows of the QKV projection, then cast the
    # MXU weight operand to bf16 (biases stay f32 and are added after the f32 accumulation).
    ch = C // num_heads
    scale = ch ** (-0.25)
    s_vec = jnp.concatenate([
        jnp.full((2 * C,), scale, dtype=jnp.float32),
        jnp.ones((C,), dtype=jnp.float32)])
    w_all = (params["w_qkv"].astype(jnp.float32) * s_vec[:, None]).astype(jnp.bfloat16)  # (3C, C)
    b_all = (params["b_qkv"].astype(jnp.float32) * s_vec).reshape(3 * C, 1)              # f32

    mean, inv = gn_stats(h, mt)                                # each (B, C, 1) f32
    q, k, v = gn_apply_qkv(
        h, mean, inv,
        params["gamma"].astype(jnp.float32).reshape(C, 1),
        params["beta"].astype(jnp.float32).reshape(C, 1),
        w_all, b_all)                                          # each (B, C, T) bf16, head-contiguous

    out = attn_proj_residual(q, k, v, h,
                             params["w_proj"].astype(jnp.bfloat16),     # (C_out, C_in)
                             params["b_proj"].astype(jnp.float32).reshape(C, 1),
                             num_heads)
    return out.reshape(B, C, H, W)


# ----------------------------------- Pure-JAX reference ----------------------------------- #
def reference(x, params, num_heads):
    B, C, H, W = x.shape
    T = H * W
    h = x.reshape(B, C, T)
    hg = h.reshape(B, GN_GROUPS, (C // GN_GROUPS) * T)
    mean = hg.mean(-1, keepdims=True)
    var = ((hg - mean) ** 2).mean(-1, keepdims=True)
    hn = ((hg - mean) / jnp.sqrt(var + GN_EPS)).reshape(B, C, T)
    hn = hn * params["gamma"][None, :, None] + params["beta"][None, :, None]
    qkv = jnp.einsum("oc,bct->bot", params["w_qkv"], hn) + params["b_qkv"][None, :, None]
    q, k, v = jnp.split(qkv, 3, axis=1)
    ch = C // num_heads
    scale = ch ** (-0.25)
    q = q.reshape(B * num_heads, ch, T)
    k = k.reshape(B * num_heads, ch, T)
    v = v.reshape(B * num_heads, ch, T)
    w = jnp.einsum("bct,bcs->bts", q * scale, k * scale)
    w = jax.nn.softmax(w, axis=-1)
    a = jnp.einsum("bts,bcs->bct", w, v).reshape(B, C, T)
    out = jnp.einsum("oc,bct->bot", params["w_proj"], a) + params["b_proj"][None, :, None]
    return x + out.reshape(B, C, H, W)


if __name__ == "__main__":
    B, C, H, W = 2, 64, 8, 8        # C must be divisible by 32 for GroupNorm(32, C)
    num_heads = 2                    # head channels = 32

    key = jax.random.PRNGKey(0)
    kx, kg, kb, kwq, kbq, kwp, kbp = jax.random.split(key, 7)

    x = jax.random.normal(kx, (B, C, H, W), dtype=jnp.float32)
    params = {
        "gamma": 1.0 + 0.1 * jax.random.normal(kg, (C,), dtype=jnp.float32),
        "beta": 0.05 * jax.random.normal(kb, (C,), dtype=jnp.float32),
        "w_qkv": 0.05 * jax.random.normal(kwq, (3 * C, C), dtype=jnp.float32),
        "b_qkv": 0.01 * jax.random.normal(kbq, (3 * C,), dtype=jnp.float32),
        "w_proj": 0.05 * jax.random.normal(kwp, (C, C), dtype=jnp.float32),
        "b_proj": 0.01 * jax.random.normal(kbp, (C,), dtype=jnp.float32),
    }

    out = multi_head_attn_block(x, params, num_heads)
    out = jax.block_until_ready(out)

    ref = reference(x, params, num_heads)
    assert out.shape == x.shape and out.dtype == x.dtype
    # Tolerance accounts for bf16 MXU operands (weights, q/k/v, probabilities) and the EUP
    # approximate reciprocal in the softmax epilogue; softmax/normalization math stays f32.
    assert jnp.allclose(out, ref, atol=5e-3, rtol=5e-3), "mismatch vs reference"

    print("KERNEL_OK")
</pallas_src>

<mosaic_0001>
module attributes {stable_mosaic.version = 11 : i64} {
  func.func @_gn_stats_kernel(%arg0: i32, %arg1: i32, %arg2: memref<1x64x64xf32, #tpu.memory_space<vmem>>, %arg3: memref<64x32xf32, #tpu.memory_space<vmem>>, %arg4: memref<1x64x1xf32, #tpu.memory_space<vmem>>, %arg5: memref<1x64x1xf32, #tpu.memory_space<vmem>>, %arg6: memref<64x1xf32, #tpu.memory_space<vmem>>, %arg7: memref<64x1xf32, #tpu.memory_space<vmem>>) attributes {dimension_semantics = [#tpu.dimension_semantics<parallel>, #tpu.dimension_semantics<arbitrary>], iteration_bounds = array<i64: 2, 1>, scalar_prefetch = 0 : i64, scratch_operands = 2 : i64, tpu.core_type = #tpu.core_type<tc>, window_params = [{transform_indices = @transform_0, window_bounds = array<i64: 1, 64, 64>}, {pipeline_mode = #tpu.pipeline_mode<synchronous>, transform_indices = @transform_1, window_bounds = array<i64: 64, 32>}, {transform_indices = @transform_2, window_bounds = array<i64: 1, 64, 1>}, {transform_indices = @transform_3, window_bounds = array<i64: 1, 64, 1>}]} {
    %c0_i32 = arith.constant 0 : i32
    %0 = arith.cmpi eq, %arg1, %c0_i32 : i32
    %1 = arith.extui %0 : i1 to i32
    %c0_i32_0 = arith.constant 0 : i32
    %2 = arith.cmpi ne, %1, %c0_i32_0 : i32
    scf.if %2 {
      %cst_15 = arith.constant 0.000000e+00 : f32
      %18 = vector.broadcast %cst_15 : f32 to vector<64x1xf32>
      %c0_16 = arith.constant 0 : index
      %c0_17 = arith.constant 0 : index
      %19 = vector.load %arg6[%c0_16, %c0_17] : memref<64x1xf32, #tpu.memory_space<vmem>>, vector<64x1xf32>
      tpu.vector_store %arg6[%c0_16, %c0_17], %18 {strides = array<i32>} : memref<64x1xf32, #tpu.memory_space<vmem>>, vector<64x1xf32>,
      %cst_18 = arith.constant 0.000000e+00 : f32
      %20 = vector.broadcast %cst_18 : f32 to vector<64x1xf32>
      %c0_19 = arith.constant 0 : index
      %c0_20 = arith.constant 0 : index
      %21 = vector.load %arg7[%c0_19, %c0_20] : memref<64x1xf32, #tpu.memory_space<vmem>>, vector<64x1xf32>
      tpu.vector_store %arg7[%c0_19, %c0_20], %20 {strides = array<i32>} : memref<64x1xf32, #tpu.memory_space<vmem>>, vector<64x1xf32>,
    } else {
    }
    %c0 = arith.constant 0 : index
    %c0_1 = arith.constant 0 : index
    %c0_2 = arith.constant 0 : index
    %3 = vector.load %arg2[%c0, %c0_1, %c0_2] : memref<1x64x64xf32, #tpu.memory_space<vmem>>, vector<1x64x64xf32>
    %4 = vector.shape_cast %3 : vector<1x64x64xf32> to vector<64x64xf32>
    %cst = arith.constant 1.000000e+00 : f32
    %5 = vector.broadcast %cst : f32 to vector<64x1xf32>
    %c0_3 = arith.constant 0 : index
    %c0_4 = arith.constant 0 : index
    %6 = vector.load %arg6[%c0_3, %c0_4] : memref<64x1xf32, #tpu.memory_space<vmem>>, vector<64x1xf32>
    %cst_5 = arith.constant dense<0.000000e+00> : vector<64x1xf32>
    %7 = tpu.matmul %4, %5, %cst_5 {dimension_numbers = #tpu.dot_dimension_numbers<[1], [0], [0], [1], [0, 0, 1, 1], [], []>} : vector<64x64xf32>, vector<64x1xf32>, vector<64x1xf32> -> vector<64x1xf32>
    %8 = arith.addf %6, %7 : vector<64x1xf32>
    %c0_6 = arith.constant 0 : index
    %c0_7 = arith.constant 0 : index
    %9 = vector.load %arg6[%c0_6, %c0_7] : memref<64x1xf32, #tpu.memory_space<vmem>>, vector<64x1xf32>
    tpu.vector_store %arg6[%c0_6, %c0_7], %8 {strides = array<i32>} : memref<64x1xf32, #tpu.memory_space<vmem>>, vector<64x1xf32>,
    %c0_8 = arith.constant 0 : index
    %c0_9 = arith.constant 0 : index
    %10 = vector.load %arg7[%c0_8, %c0_9] : memref<64x1xf32, #tpu.memory_space<vmem>>, vector<64x1xf32>
    %11 = arith.mulf %4, %4 : vector<64x64xf32>
    %cst_10 = arith.constant dense<0.000000e+00> : vector<64x1xf32>
    %12 = tpu.matmul %11, %5, %cst_10 {dimension_numbers = #tpu.dot_dimension_numbers<[1], [0], [0], [1], [0, 0, 1, 1], [], []>} : vector<64x64xf32>, vector<64x1xf32>, vector<64x1xf32> -> vector<64x1xf32>
    %13 = arith.addf %10, %12 : vector<64x1xf32>
    %c0_11 = arith.constant 0 : index
    %c0_12 = arith.constant 0 : index
    %14 = vector.load %arg7[%c0_11, %c0_12] : memref<64x1xf32, #tpu.memory_space<vmem>>, vector<64x1xf32>
    tpu.vector_store %arg7[%c0_11, %c0_12], %13 {strides = array<i32>} : memref<64x1xf32, #tpu.memory_space<vmem>>, vector<64x1xf32>,
    %c0_i32_13 = arith.constant 0 : i32
    %15 = arith.cmpi eq, %arg1, %c0_i32_13 : i32
    %16 = arith.extui %15 : i1 to i32
    %c0_i32_14 = arith.constant 0 : i32
    %17 = arith.cmpi ne, %16, %c0_i32_14 : i32
    scf.if %17 {
      %c0_15 = arith.constant 0 : index
      %c0_16 = arith.constant 0 : index
      %18 = vector.load %arg3[%c0_15, %c0_16] : memref<64x32xf32, #tpu.memory_space<vmem>>, vector<64x32xf32>
      %c0_17 = arith.constant 0 : index
      %c0_18 = arith.constant 0 : index
      %19 = vector.load %arg6[%c0_17, %c0_18] : memref<64x1xf32, #tpu.memory_space<vmem>>, vector<64x1xf32>
      %cst_19 = arith.constant dense<0.000000e+00> : vector<32x1xf32>
      %20 = tpu.matmul %18, %19, %cst_19 {dimension_numbers = #tpu.dot_dimension_numbers<[0], [0], [1], [1], [0, 1, 1, 1], [], []>} : vector<64x32xf32>, vector<64x1xf32>, vector<32x1xf32> -> vector<32x1xf32>
      %c0_20 = arith.constant 0 : index
      %c0_21 = arith.constant 0 : index
      %21 = vector.load %arg7[%c0_20, %c0_21] : memref<64x1xf32, #tpu.memory_space<vmem>>, vector<64x1xf32>
      %cst_22 = arith.constant dense<0.000000e+00> : vector<32x1xf32>
      %22 = tpu.matmul %18, %21, %cst_22 {dimension_numbers = #tpu.dot_dimension_numbers<[0], [0], [1], [1], [0, 1, 1, 1], [], []>} : vector<64x32xf32>, vector<64x1xf32>, vector<32x1xf32> -> vector<32x1xf32>
      %cst_23 = arith.constant 1.280000e+02 : f32
      %23 = vector.broadcast %cst_23 : f32 to vector<32x1xf32>
      %24 = arith.divf %20, %23 : vector<32x1xf32>
      %cst_24 = arith.constant 1.280000e+02 : f32
      %25 = vector.broadcast %cst_24 : f32 to vector<32x1xf32>
      %26 = arith.divf %22, %25 : vector<32x1xf32>
      %27 = arith.mulf %24, %24 : vector<32x1xf32>
      %28 = arith.subf %26, %27 : vector<32x1xf32>
      %cst_25 = arith.constant 0.000000e+00 : f32
      %29 = vector.broadcast %cst_25 : f32 to vector<32x1xf32>
      %30 = arith.maximumf %28, %29 : vector<32x1xf32>
      %cst_26 = arith.constant 9.99999974E-6 : f32
      %31 = vector.broadcast %cst_26 : f32 to vector<32x1xf32>
      %32 = arith.addf %30, %31 : vector<32x1xf32>
      %33 = math.rsqrt %32 : vector<32x1xf32>
      %cst_27 = arith.constant dense<0.000000e+00> : vector<64x1xf32>
      %34 = tpu.matmul %18, %24, %cst_27 {dimension_numbers = #tpu.dot_dimension_numbers<[1], [0], [0], [1], [0, 0, 1, 1], [], []>} : vector<64x32xf32>, vector<32x1xf32>, vector<64x1xf32> -> vector<64x1xf32>
      %c0_28 = arith.constant 0 : index
      %c0_29 = arith.constant 0 : index
      %c0_30 = arith.constant 0 : index
      %35 = vector.load %arg4[%c0_28, %c0_29, %c0_30] : memref<1x64x1xf32, #tpu.memory_space<vmem>>, vector<1x64x1xf32>
      %36 = vector.shape_cast %35 : vector<1x64x1xf32> to vector<64x1xf32>
      %37 = vector.shape_cast %34 : vector<64x1xf32> to vector<1x64x1xf32>
      tpu.vector_store %arg4[%c0_28, %c0_29, %c0_30], %37 {strides = array<i32>} : memref<1x64x1xf32, #tpu.memory_space<vmem>>, vector<1x64x1xf32>,
      %cst_31 = arith.constant dense<0.000000e+00> : vector<64x1xf32>
      %38 = tpu.matmul %18, %33, %cst_31 {dimension_numbers = #tpu.dot_dimension_numbers<[1], [0], [0], [1], [0, 0, 1, 1], [], []>} : vector<64x32xf32>, vector<32x1xf32>, vector<64x1xf32> -> vector<64x1xf32>
      %c0_32 = arith.constant 0 : index
      %c0_33 = arith.constant 0 : index
      %c0_34 = arith.constant 0 : index
      %39 = vector.load %arg5[%c0_32, %c0_33, %c0_34] : memref<1x64x1xf32, #tpu.memory_space<vmem>>, vector<1x64x1xf32>
      %40 = vector.shape_cast %39 : vector<1x64x1xf32> to vector<64x1xf32>
      %41 = vector.shape_cast %38 : vector<64x1xf32> to vector<1x64x1xf32>
      tpu.vector_store %arg5[%c0_32, %c0_33, %c0_34], %41 {strides = array<i32>} : memref<1x64x1xf32, #tpu.memory_space<vmem>>, vector<1x64x1xf32>,
    } else {
    }
    return
  }
  func.func @transform_0(%arg0: i32, %arg1: i32) -> (i32, i32, i32) {
    %c0_i32 = arith.constant 0 : i32
    %c0_i32_0 = arith.constant 0 : i32
    return %arg0, %c0_i32, %arg1 : i32, i32, i32
  }
  func.func @transform_1(%arg0: i32, %arg1: i32) -> (i32, i32) {
    %c0_i32 = arith.constant 0 : i32
    %c0_i32_0 = arith.constant 0 : i32
    %c0_i32_1 = arith.constant 0 : i32
    return %c0_i32, %c0_i32_0 : i32, i32
  }
  func.func @transform_2(%arg0: i32, %arg1: i32) -> (i32, i32, i32) {
    %c0_i32 = arith.constant 0 : i32
    %c0_i32_0 = arith.constant 0 : i32
    %c0_i32_1 = arith.constant 0 : i32
    return %arg0, %c0_i32, %c0_i32_0 : i32, i32, i32
  }
  func.func @transform_3(%arg0: i32, %arg1: i32) -> (i32, i32, i32) {
    %c0_i32 = arith.constant 0 : i32
    %c0_i32_0 = arith.constant 0 : i32
    %c0_i32_1 = arith.constant 0 : i32
    return %arg0, %c0_i32, %c0_i32_0 : i32, i32, i32
  }
}

</mosaic_0001>

<llo_original>
// kernel: tpu_custom_call.1
$region0: #{tpu_custom_call.1}
  #allocation0 [shape = 'u32[]', space=smem, size = 0x4, offset = 0x4, fixed_abs, tag = 'smem constant byte address 0x4 - core index']
  #allocation1 [shape = 'u32[144,128]{1,0:T(1,128)}', space=vmem, size = 0x12000, scoped, tag = 'internal scratch']
  #allocation2 [shape = 'f32[64,1]{1,0:T(8,128)}', space=vmem, size = 0x8000, scoped, tag = 'scratch operand']
  #allocation3 [shape = 'f32[64,1]{1,0:T(8,128)}', space=vmem, size = 0x8000, scoped, tag = 'scratch operand']
  %s0 = inlined_call_operand.hbm [shape: f32[2,64,64], index: 0, kind: input, shape index: {}]
  %s1 = inlined_call_operand.vmem [shape: f32[64,32], index: 1, kind: input, shape index: {}]
  %s2 = inlined_call_operand.vmem [shape: f32[2,64,1], index: 2, kind: output, shape index: {0}]
  %s3 = inlined_call_operand.vmem [shape: f32[2,64,1], index: 3, kind: output, shape index: {1}]
  %4 = xla_tuple %s2, %s3
  %s5 = sld [smem:[#allocation0]]
  $region61: #{tpu_custom_call.1} parent=0
    _
  %s7 = ssub.s32 1, %s5
  %s8 = scalar_select 0, %s7, %s5
  $region1: #{tpu_custom_call.1} parent=0
    #allocation4 [shape = 'u8[65536]{0}', space=vmem, size = 0x10000, scoped, tag = 'input window, operand 0']
    #allocation5 [shape = 's32[2]{0}', space=sflag, size = 0x8, scoped, tag = 'scoped memory for tpu_custom_call.1']
    %9 = vsyncpa [#allocation5], 0
    %s10 = scalar_lea.sflag [#allocation5], 1
    %11 = vsyncpa %s10, 0
    loop: start=0, step=1, limit=4
    $region2: #{tpu_custom_call.1} parent=1 // loop_pre_header
      _
    $region3: #{tpu_custom_call.1} parent=1 // loop_header
      %s13 = sphi 0, %s17
      %p14 = scmp.ge.s32.totalorder %s13, 4
      %s20 = sphi 0, %s32
      %s21 = sphi 0, %s28
      %s22 = sphi 0, %s20
      %s23 = sphi 0, %s21
      %s24 = sphi 0, %s22
      %s25 = sphi 0, %s23
      %s37 = sphi 0, %s39
      %s40 = sphi 0, %s37
      %s41 = sphi 0, %s40
      %s57 = sphi 0, %s41
      %s61 = sphi 0, %s61
      %s63 = sphi 0, %s61
      %s64 = sphi 0, %s63
      %s78 = sphi 0, %s64
      %s84 = sphi 0, %s86
      %s87 = sphi 0, %s84
      %s88 = sphi 0, %s87
      %s104 = sphi 0, %s88
      %s110 = sphi 0, %s112
      %s113 = sphi 0, %s110
      %s114 = sphi 0, %s113
      %s130 = sphi 0, %s114
    $region4: #{tpu_custom_call.1} parent=1 // loop_header_branch
      %16 = sbr.rel (%p14) target = $region8
    $region5: #{tpu_custom_call.1} parent=1 // loop_body
      %s18 = ssub.s32 %s13, 1
      %s19 = ssub.s32 %s13, 2
      %s26 = sadd.s32 1, %s21
      %p27 = scmp.ge.s32.totalorder %s26, 1
      %s28 = scalar_select %p27, 0, %s26
      %s29 = sadd.s32 1, %s20
      %s30 = scalar_select %p27, %s29, %s20
      %p31 = scmp.ge.s32.totalorder %s30, 2
      %s32 = scalar_select %p31, 0, %s30
      %s33 = ssub.s32 %s20, %s32
      %s34 = ssub.s32 %s21, %s28
      %s35 = sor.u32 %s33, %s34
      %p36 = scmp.eq.s32.totalorder %s35, 0
      %s38 = sadd.s32 %s37, 1
      %s39 = scalar_select %p36, %s37, %s38
      %p42 = pneg %p36
      %p43 = scmp.eq.s32.totalorder %s13, 1
      %p44 = por %p42, %p43
      %p45 = scmp.ne.s32.totalorder %s37, %s40
      %p46 = scmp.eq.s32.totalorder %s13, 0
      %p47 = por %p45, %p46
      %p48 = scmp.ne.s32.totalorder %s37, %s40
      %p49 = scmp.eq.s32.totalorder %s18, 1
      %p50 = por %p48, %p49
      %p51 = scmp.ne.s32.totalorder %s40, %s41
      %p52 = scmp.eq.s32.totalorder %s18, 0
      %p53 = por %p51, %p52
      %p54 = scmp.ne.s32.totalorder %s40, %s41
      %p55 = scmp.eq.s32.totalorder %s19, 1
      %p56 = por %p54, %p55
      %p58 = scmp.ne.s32.totalorder %s41, %s57
      %p59 = scmp.eq.s32.totalorder %s19, 0
      %p60 = por %p58, %p59
      %s62 = sadd.s32 %s61, 1
      %p65 = scmp.eq.s32.totalorder %s13, 1
      %p66 = scmp.ne.s32.totalorder %s61, %s63
      %p67 = scmp.eq.s32.totalorder %s13, 0
      %p68 = por %p66, %p67
      %p69 = scmp.ne.s32.totalorder %s61, %s63
      %p70 = scmp.eq.s32.totalorder %s18, 1
      %p71 = por %p69, %p70
      %p72 = scmp.ne.s32.totalorder %s63, %s64
      %p73 = scmp.eq.s32.totalorder %s18, 0
      %p74 = por %p72, %p73
      %p75 = scmp.ne.s32.totalorder %s63, %s64
      %p76 = scmp.eq.s32.totalorder %s19, 1
      %p77 = por %p75, %p76
      %p79 = scmp.ne.s32.totalorder %s64, %s78
      %p80 = scmp.eq.s32.totalorder %s19, 0
      %p81 = por %p79, %p80
      %s82 = ssub.s32 %s20, %s32
      %p83 = scmp.eq.s32.totalorder %s82, 0
      %s85 = sadd.s32 %s84, 1
      %s86 = scalar_select %p83, %s84, %s85
      %p89 = pneg %p83
      %p90 = scmp.eq.s32.totalorder %s13, 1
      %p91 = por %p89, %p90
      %p92 = scmp.ne.s32.totalorder %s84, %s87
      %p93 = scmp.eq.s32.totalorder %s13, 0
      %p94 = por %p92, %p93
      %p95 = scmp.ne.s32.totalorder %s84, %s87
      %p96 = scmp.eq.s32.totalorder %s18, 1
      %p97 = por %p95, %p96
      %p98 = scmp.ne.s32.totalorder %s87, %s88
      %p99 = scmp.eq.s32.totalorder %s18, 0
      %p100 = por %p98, %p99
      %p101 = scmp.ne.s32.totalorder %s87, %s88
      %p102 = scmp.eq.s32.totalorder %s19, 1
      %p103 = por %p101, %p102
      %p105 = scmp.ne.s32.totalorder %s88, %s104
      %p106 = scmp.eq.s32.totalorder %s19, 0
      %p107 = por %p105, %p106
      %s108 = ssub.s32 %s20, %s32
      %p109 = scmp.eq.s32.totalorder %s108, 0
      %s111 = sadd.s32 %s110, 1
      %s112 = scalar_select %p109, %s110, %s111
      %p115 = pneg %p109
      %p116 = scmp.eq.s32.totalorder %s13, 1
      %p117 = por %p115, %p116
      %p118 = scmp.ne.s32.totalorder %s110, %s113
      %p119 = scmp.eq.s32.totalorder %s13, 0
      %p120 = por %p118, %p119
      %p121 = scmp.ne.s32.totalorder %s110, %s113
      %p122 = scmp.eq.s32.totalorder %s18, 1
      %p123 = por %p121, %p122
      %p124 = scmp.ne.s32.totalorder %s113, %s114
      %p125 = scmp.eq.s32.totalorder %s18, 0
      %p126 = por %p124, %p125
      %p127 = scmp.ne.s32.totalorder %s113, %s114
      %p128 = scmp.eq.s32.totalorder %s19, 1
      %p129 = por %p127, %p128
      %p131 = scmp.ne.s32.totalorder %s114, %s130
      %p132 = scmp.eq.s32.totalorder %s19, 0
      %p133 = por %p131, %p132
      %p134 = scmp.le.s32.totalorder 1, %s13
      %p135 = scmp.lt.s32.totalorder %s13, 3
      %p136 = pnand %p134, %p135
      %p137 = pneg %p136
      // Predicated region
      $region9: #{tpu_custom_call.1} parent=5 // pred_check
        _
      $region10: #{tpu_custom_call.1} parent=5 // pred_check_branch
        %139 = sbr.rel (%p136) target = $region12
      $region11: #{tpu_custom_call.1} parent=5 // pred_region
        %s140 = ssub.s32 %s13, 1
        // Predicated region
        $region13: #{tpu_custom_call.1} parent=11 // pred_check
          %p141 = pneg %p74
        $region14: #{tpu_custom_call.1} parent=11 // pred_check_branch
          %143 = sbr.rel (%p141) target = $region16
        $region15: #{tpu_custom_call.1} parent=11 // pred_region
          _
        $region16: #{tpu_custom_call.1} parent=11 // pred_fallthru
          _
      $region12: #{tpu_custom_call.1} parent=5 // pred_fallthru
        _
      %p144 = scmp.lt.s32.totalorder %s13, 2
      // Predicated region
      $region17: #{tpu_custom_call.1} parent=5 // pred_check
        %p145 = pneg %p144
      $region18: #{tpu_custom_call.1} parent=5 // pred_check_branch
        %147 = sbr.rel (%p145) target = $region20
      $region19: #{tpu_custom_call.1} parent=5 // pred_region
        // Predicated region
        $region21: #{tpu_custom_call.1} parent=19 // pred_check
          %p148 = pneg %p47
        $region22: #{tpu_custom_call.1} parent=19 // pred_check_branch
          %150 = sbr.rel (%p148) target = $region24
        $region23: #{tpu_custom_call.1} parent=19 // pred_region
          %s151 = sand.u32 %s37, 1
          %s152 = scalar_lea.sflag [#allocation5], %s151
          %s153 = sand.u32 %s37, 1
          %s154 = smul.addr %s153, 64
          %s155 = scalar_lea.vmem [#allocation4], %s154
          %s157 = ssub.s32 1024, 1024
          %158 = vsyncadd %s152, %s157
          %s159 = smul.addr %s20, 8
          %s160 = sadd.s32 %s21, %s159
          %s161 = smul.addr %s160, 128
          %s162 = scalar_lea.hbm %s0, %s161
          %s163 = sshll.u32 %s155, 4
          %s164 = int_to_ptr.vmem [resolvable:$true] %s163
          %169 = dma.hbm_to_vmem [thread:$0]  %s162, 1024, %s164, %s152, 128, 128, 8
        $region24: #{tpu_custom_call.1} parent=19 // pred_fallthru
          _
      $region20: #{tpu_custom_call.1} parent=5 // pred_fallthru
        _
      %p170 = scmp.le.s32.totalorder 1, %s13
      %p171 = scmp.lt.s32.totalorder %s13, 3
      %p172 = pnand %p170, %p171
      %p173 = pneg %p172
      // Predicated region
      $region25: #{tpu_custom_call.1} parent=5 // pred_check
        _
      $region26: #{tpu_custom_call.1} parent=5 // pred_check_branch
        %175 = sbr.rel (%p172) target = $region28
      $region27: #{tpu_custom_call.1} parent=5 // pred_region
        %s176 = ssub.s32 %s13, 1
        %s177 = sand.u32 %s40, 1
        %s178 = scalar_lea.sflag [#allocation5], %s177
        %s179 = sand.u32 %s40, 1
        %s180 = smul.addr %s179, 64
        %s181 = scalar_lea.vmem [#allocation4], %s180
        // Predicated region
        $region29: #{tpu_custom_call.1} parent=27 // pred_check
          %p182 = pneg %p53
        $region30: #{tpu_custom_call.1} parent=27 // pred_check_branch
          %184 = sbr.rel (%p182) target = $region32
        $region31: #{tpu_custom_call.1} parent=27 // pred_region
          %185 = dma.done %s178, 1024
        $region32: #{tpu_custom_call.1} parent=27 // pred_fallthru
          _
        %s186 = sand.u32 %s40, 1
        %s187 = scalar_lea.sflag [#allocation5], %s186
        %s188 = sand.u32 %s40, 1
        %s189 = smul.addr %s188, 64
        %s190 = scalar_lea.vmem [#allocation4], %s189
        %p191 = pneg %p53
        %p192 = pneg %p50
        %p193 = pneg %p74
        %p194 = pneg %p71
        %p195 = pneg %p100
        %p196 = pneg %p97
        %p197 = scmp.lt.s32.totalorder %s22, 1
        %s198 = scalar_select %p197, %s22, 1
        %s199 = smul.addr %s198, 8
        %s200 = smul.addr %s199, 8
        %s201 = scalar_lea.vmem %s2, %s200
        %p202 = pneg %p126
        %p203 = pneg %p123
        %p204 = scmp.lt.s32.totalorder %s22, 1
        %s205 = scalar_select %p204, %s22, 1
        %s206 = smul.addr %s205, 8
        %s207 = smul.addr %s206, 8
        %s208 = scalar_lea.vmem %s3, %s207
        %p209 = scmp.lt.s32.totalorder %s22, 1
        %s210 = scalar_select %p209, %s22, 1
        %s211 = smul.addr %s210, 8
        %s212 = smul.addr %s211, 8
        %s213 = scalar_lea.vmem %s2, %s212
        %p214 = scmp.lt.s32.totalorder %s22, 1
        %s215 = scalar_select %p214, %s22, 1
        %s216 = smul.addr %s215, 8
        %s217 = smul.addr %s216, 8
        %s218 = scalar_lea.vmem %s3, %s217
        %p219 = scmp.eq.s32.totalorder %s23, 0
        // Predicated region
        $region33: #{tpu_custom_call.1} parent=27 // pred_check
          %p220 = pneg %p219
        $region34: #{tpu_custom_call.1} parent=27 // pred_check_branch
          %222 = sbr.rel (%p220) target = $region36
        $region35: #{tpu_custom_call.1} parent=27 // pred_region
          %vm223 = vcmask 7168
          %224 = vst.msk [vmem:[#allocation2] sm:$0xff] %vm223, 0.0
          %225 = vst.msk [vmem:[#allocation2 + $0x8] sm:$0xff] %vm223, 0.0
          %226 = vst.msk [vmem:[#allocation2 + $0x10] sm:$0xff] %vm223, 0.0
          %227 = vst.msk [vmem:[#allocation2 + $0x18] sm:$0xff] %vm223, 0.0
          %228 = vst.msk [vmem:[#allocation2 + $0x20] sm:$0xff] %vm223, 0.0
          %229 = vst.msk [vmem:[#allocation2 + $0x28] sm:$0xff] %vm223, 0.0
          %230 = vst.msk [vmem:[#allocation2 + $0x30] sm:$0xff] %vm223, 0.0
          %231 = vst.msk [vmem:[#allocation2 + $0x38] sm:$0xff] %vm223, 0.0
          %232 = vst.msk [vmem:[#allocation3] sm:$0xff] %vm223, 0.0
          %233 = vst.msk [vmem:[#allocation3 + $0x8] sm:$0xff] %vm223, 0.0
          %234 = vst.msk [vmem:[#allocation3 + $0x10] sm:$0xff] %vm223, 0.0
          %235 = vst.msk [vmem:[#allocation3 + $0x18] sm:$0xff] %vm223, 0.0
          %236 = vst.msk [vmem:[#allocation3 + $0x20] sm:$0xff] %vm223, 0.0
          %237 = vst.msk [vmem:[#allocation3 + $0x28] sm:$0xff] %vm223, 0.0
          %238 = vst.msk [vmem:[#allocation3 + $0x30] sm:$0xff] %vm223, 0.0
          %239 = vst.msk [vmem:[#allocation3 + $0x38] sm:$0xff] %vm223, 0.0
        $region36: #{tpu_custom_call.1} parent=27 // pred_fallthru
          _
        %v240 = vld [vmem:[%s181] sm:$0xff]
        %v241 = vld [vmem:[%s181 + $0x8] sm:$0xff]
        %v242 = vld [vmem:[%s181 + $0x10] sm:$0xff]
        %v243 = vld [vmem:[%s181 + $0x18] sm:$0xff]
        %v244 = vld [vmem:[%s181 + $0x20] sm:$0xff]
        %v245 = vld [vmem:[%s181 + $0x28] sm:$0xff]
        %v246 = vld [vmem:[%s181 + $0x30] sm:$0xff]
        %v247 = vld [vmem:[%s181 + $0x38] sm:$0xff]
        %v248 = vld [vmem:[#allocation2] sm:$0xff]
        %v249 = vld [vmem:[#allocation2 + $0x8] sm:$0xff]
        %v250 = vld [vmem:[#allocation2 + $0x10] sm:$0xff]
        %v251 = vld [vmem:[#allocation2 + $0x18] sm:$0xff]
        %v252 = vld [vmem:[#allocation2 + $0x20] sm:$0xff]
        %v253 = vld [vmem:[#allocation2 + $0x28] sm:$0xff]
        %v254 = vld [vmem:[#allocation2 + $0x30] sm:$0xff]
        %v255 = vld [vmem:[#allocation2 + $0x38] sm:$0xff]
        %vm256 = vcmask 523264
        %v258 = vsel %vm256, %v240, 0
        %v261 = vsel %vm256, %v241, 0
        %v264 = vsel %vm256, %v242, 0
        %v267 = vsel %vm256, %v243, 0
        %v270 = vsel %vm256, %v244, 0
        %v273 = vsel %vm256, %v245, 0
        %v276 = vsel %vm256, %v246, 0
        %v279 = vsel %vm256, %v247, 0
        %281 = vmatprep.subr.mxu0 0.0
        %282 = vmatpush1.msra.mxu0 1.0
        %283 = vmatprep.subr.mxu0 0.0
        %284 = vmatpush1.msra.mxu0 1.0
        %285 = vmatprep.subr.mxu0 0.0
        %286 = vmatpush1.msra.mxu0 1.0
        %287 = vmatprep.subr.mxu0 0.0
        %288 = vmatpush1.msra.mxu0 1.0
        %289 = vmatprep.subr.mxu0 0.0
        %290 = vmatpush1.msra.mxu0 1.0
        %291 = vmatprep.subr.mxu0 0.0
        %292 = vmatpush1.msra.mxu0 1.0
        %293 = vmatprep.subr.mxu0 0.0
        %294 = vmatpush1.msra.mxu0 1.0
        %295 = vmatprep.subr.mxu0 0.0
        %296 = vmatpush1.msra.mxu0 1.0
        %297 = vmatprep.subr.mxu0 0.0
        %298 = vmatpush1.msra.mxu0 0.0
        %299 = vmatprep.subr.mxu0 0.0
        %300 = vmatpush1.msra.mxu0 0.0
        %301 = vmatprep.subr.mxu0 0.0
        %302 = vmatpush1.msra.mxu0 0.0
        %303 = vmatprep.subr.mxu0 0.0
        %304 = vmatpush1.msra.mxu0 0.0
        %305 = vmatprep.subr.mxu0 0.0
        %306 = vmatpush1.msra.mxu0 0.0
        %307 = vmatprep.subr.mxu0 0.0
        %308 = vmatpush1.msra.mxu0 0.0
        %309 = vmatprep.subr.mxu0 0.0
        %310 = vmatpush1.msra.mxu0 0.0
        %311 = vmatprep.subr.mxu0 0.0
        %312 = vmatpush1.msra.mxu0 0.0
        %313 = vmatprep.subr.mxu0 0.0
        %314 = vmatpush1.msra.mxu0 0.0
        %315 = vmatprep.subr.mxu0 0.0
        %316 = vmatpush1.msra.mxu0 0.0
        %317 = vmatprep.subr.mxu0 0.0
        %318 = vmatpush1.msra.mxu0 0.0
        %319 = vmatprep.subr.mxu0 0.0
        %320 = vmatpush1.msra.mxu0 0.0
        %321 = vmatprep.subr.mxu0 0.0
        %322 = vmatpush1.msra.mxu0 0.0
        %323 = vmatprep.subr.mxu0 0.0
        %324 = vmatpush1.msra.mxu0 0.0
        %325 = vmatprep.subr.mxu0 0.0
        %326 = vmatpush1.msra.mxu0 0.0
        %327 = vmatprep.subr.mxu0 0.0
        %328 = vmatpush1.msra.mxu0 0.0
        %329 = vmatprep.subr.mxu0 0.0
        %330 = vmatpush1.msra.mxu0 0.0
        %331 = vmatprep.subr.mxu0 0.0
        %332 = vmatpush1.msra.mxu0 0.0
        %333 = vmatprep.subr.mxu0 0.0
        %334 = vmatpush1.msra.mxu0 0.0
        %335 = vmatprep.subr.mxu0 0.0
        %336 = vmatpush1.msra.mxu0 0.0
        %337 = vmatprep.subr.mxu0 0.0
        %338 = vmatpush1.msra.mxu0 0.0
        %339 = vmatprep.subr.mxu0 0.0
        %340 = vmatpush1.msra.mxu0 0.0
        %341 = vmatprep.subr.mxu0 0.0
        %342 = vmatpush1.msra.mxu0 0.0
        %343 = vmatprep.subr.mxu0 0.0
        %344 = vmatpush1.msra.mxu0 0.0
        %345 = vmatprep.mubr.f32.mxu0 0.0
        %346 = vmatmul.mubr.f32.gmra.mrb[0].mxu0 %v258
        %v347 = vpop.f32.mrb[0].mxu0
        %v348 = vadd.f32 0.0, %v347
        %v349 = vpop.f32.mrb[0].mxu0
        %350 = vmatprep.mubr.f32.mxu0 0.0
        %351 = vmatmul.mubr.f32.gmra.mrb[0].mxu0 %v261
        %v352 = vpop.f32.mrb[0].mxu0
        %v353 = vadd.f32 0.0, %v352
        %v354 = vpop.f32.mrb[0].mxu0
        %355 = vmatprep.mubr.f32.mxu0 0.0
        %356 = vmatmul.mubr.f32.gmra.mrb[0].mxu0 %v264
        %v357 = vpop.f32.mrb[0].mxu0
        %v358 = vadd.f32 0.0, %v357
        %v359 = vpop.f32.mrb[0].mxu0
        %360 = vmatprep.mubr.f32.mxu0 0.0
        %361 = vmatmul.mubr.f32.gmra.mrb[0].mxu0 %v267
        %v362 = vpop.f32.mrb[0].mxu0
        %v363 = vadd.f32 0.0, %v362
        %v364 = vpop.f32.mrb[0].mxu0
        %365 = vmatprep.mubr.f32.mxu0 0.0
        %366 = vmatmul.mubr.f32.gmra.mrb[0].mxu0 %v270
        %v367 = vpop.f32.mrb[0].mxu0
        %v368 = vadd.f32 0.0, %v367
        %v369 = vpop.f32.mrb[0].mxu0
        %370 = vmatprep.mubr.f32.mxu0 0.0
        %371 = vmatmul.mubr.f32.gmra.mrb[0].mxu0 %v273
        %v372 = vpop.f32.mrb[0].mxu0
        %v373 = vadd.f32 0.0, %v372
        %v374 = vpop.f32.mrb[0].mxu0
        %375 = vmatprep.mubr.f32.mxu0 0.0
        %376 = vmatmul.mubr.f32.gmra.mrb[0].mxu0 %v276
        %v377 = vpop.f32.mrb[0].mxu0
        %v378 = vadd.f32 0.0, %v377
        %v379 = vpop.f32.mrb[0].mxu0
        %380 = vmatprep.mubr.f32.mxu0 0.0
        %381 = vmatmul.mubr.f32.gmra.mrb[0].mxu0 %v279
        %v382 = vpop.f32.mrb[0].mxu0
        %v383 = vadd.f32 0.0, %v382
        %v384 = vpop.f32.mrb[0].mxu0
        %385 = vdwg.mxu0
        %v386 = vadd.f32 %v248, %v348
        %v387 = vadd.f32 %v249, %v353
        %v388 = vadd.f32 %v250, %v358
        %v389 = vadd.f32 %v251, %v363
        %v390 = vadd.f32 %v252, %v368
        %v391 = vadd.f32 %v253, %v373
        %v392 = vadd.f32 %v254, %v378
        %v393 = vadd.f32 %v255, %v383
        %vm394 = vcmask 7168
        %395 = vst.msk [vmem:[#allocation2] sm:$0xff] %vm394, %v386
        %396 = vst.msk [vmem:[#allocation2 + $0x8] sm:$0xff] %vm394, %v387
        %397 = vst.msk [vmem:[#allocation2 + $0x10] sm:$0xff] %vm394, %v388
        %398 = vst.msk [vmem:[#allocation2 + $0x18] sm:$0xff] %vm394, %v389
        %399 = vst.msk [vmem:[#allocation2 + $0x20] sm:$0xff] %vm394, %v390
        %400 = vst.msk [vmem:[#allocation2 + $0x28] sm:$0xff] %vm394, %v391
        %401 = vst.msk [vmem:[#allocation2 + $0x30] sm:$0xff] %vm394, %v392
        %402 = vst.msk [vmem:[#allocation2 + $0x38] sm:$0xff] %vm394, %v393
        %v403 = vld [vmem:[#allocation3] sm:$0xff]
        %v404 = vld [vmem:[#allocation3 + $0x8] sm:$0xff]
        %v405 = vld [vmem:[#allocation3 + $0x10] sm:$0xff]
        %v406 = vld [vmem:[#allocation3 + $0x18] sm:$0xff]
        %v407 = vld [vmem:[#allocation3 + $0x20] sm:$0xff]
        %v408 = vld [vmem:[#allocation3 + $0x28] sm:$0xff]
        %v409 = vld [vmem:[#allocation3 + $0x30] sm:$0xff]
        %v410 = vld [vmem:[#allocation3 + $0x38] sm:$0xff]
        %v411 = vmul.f32 %v240, %v240
        %v412 = vmul.f32 %v241, %v241
        %v413 = vmul.f32 %v242, %v242
        %v414 = vmul.f32 %v243, %v243
        %v415 = vmul.f32 %v244, %v244
        %v416 = vmul.f32 %v245, %v245
        %v417 = vmul.f32 %v246, %v246
        %v418 = vmul.f32 %v247, %v247
        %v420 = vsel %vm256, %v411, 0
        %v423 = vsel %vm256, %v412, 0
        %v426 = vsel %vm256, %v413, 0
        %v429 = vsel %vm256, %v414, 0
        %v432 = vsel %vm256, %v415, 0
        %v435 = vsel %vm256, %v416, 0
        %v438 = vsel %vm256, %v417, 0
        %v441 = vsel %vm256, %v418, 0
        %443 = vmatprep.subr.mxu0 0.0
        %444 = vmatpush1.msra.mxu0 1.0
        %445 = vmatprep.subr.mxu0 0.0
        %446 = vmatpush1.msra.mxu0 1.0
        %447 = vmatprep.subr.mxu0 0.0
        %448 = vmatpush1.msra.mxu0 1.0
        %449 = vmatprep.subr.mxu0 0.0
        %450 = vmatpush1.msra.mxu0 1.0
        %451 = vmatprep.subr.mxu0 0.0
        %452 = vmatpush1.msra.mxu0 1.0
        %453 = vmatprep.subr.mxu0 0.0
        %454 = vmatpush1.msra.mxu0 1.0
        %455 = vmatprep.subr.mxu0 0.0
        %456 = vmatpush1.msra.mxu0 1.0
        %457 = vmatprep.subr.mxu0 0.0
        %458 = vmatpush1.msra.mxu0 1.0
        %459 = vmatprep.subr.mxu0 0.0
        %460 = vmatpush1.msra.mxu0 0.0
        %461 = vmatprep.subr.mxu0 0.0
        %462 = vmatpush1.msra.mxu0 0.0
        %463 = vmatprep.subr.mxu0 0.0
        %464 = vmatpush1.msra.mxu0 0.0
        %465 = vmatprep.subr.mxu0 0.0
        %466 = vmatpush1.msra.mxu0 0.0
        %467 = vmatprep.subr.mxu0 0.0
        %468 = vmatpush1.msra.mxu0 0.0
        %469 = vmatprep.subr.mxu0 0.0
        %470 = vmatpush1.msra.mxu0 0.0
        %471 = vmatprep.subr.mxu0 0.0
        %472 = vmatpush1.msra.mxu0 0.0
        %473 = vmatprep.subr.mxu0 0.0
        %474 = vmatpush1.msra.mxu0 0.0
        %475 = vmatprep.subr.mxu0 0.0
        %476 = vmatpush1.msra.mxu0 0.0
        %477 = vmatprep.subr.mxu0 0.0
        %478 = vmatpush1.msra.mxu0 0.0
        %479 = vmatprep.subr.mxu0 0.0
        %480 = vmatpush1.msra.mxu0 0.0
        %481 = vmatprep.subr.mxu0 0.0
        %482 = vmatpush1.msra.mxu0 0.0
        %483 = vmatprep.subr.mxu0 0.0
        %484 = vmatpush1.msra.mxu0 0.0
        %485 = vmatprep.subr.mxu0 0.0
        %486 = vmatpush1.msra.mxu0 0.0
        %487 = vmatprep.subr.mxu0 0.0
        %488 = vmatpush1.msra.mxu0 0.0
        %489 = vmatprep.subr.mxu0 0.0
        %490 = vmatpush1.msra.mxu0 0.0
        %491 = vmatprep.subr.mxu0 0.0
        %492 = vmatpush1.msra.mxu0 0.0
        %493 = vmatprep.subr.mxu0 0.0
        %494 = vmatpush1.msra.mxu0 0.0
        %495 = vmatprep.subr.mxu0 0.0
        %496 = vmatpush1.msra.mxu0 0.0
        %497 = vmatprep.subr.mxu0 0.0
        %498 = vmatpush1.msra.mxu0 0.0
        %499 = vmatprep.subr.mxu0 0.0
        %500 = vmatpush1.msra.mxu0 0.0
        %501 = vmatprep.subr.mxu0 0.0
        %502 = vmatpush1.msra.mxu0 0.0
        %503 = vmatprep.subr.mxu0 0.0
        %504 = vmatpush1.msra.mxu0 0.0
        %505 = vmatprep.subr.mxu0 0.0
        %506 = vmatpush1.msra.mxu0 0.0
        %507 = vmatprep.mubr.f32.mxu0 0.0
        %508 = vmatmul.mubr.f32.gmra.mrb[0].mxu0 %v420
        %v509 = vpop.f32.mrb[0].mxu0
        %v510 = vadd.f32 0.0, %v509
        %v511 = vpop.f32.mrb[0].mxu0
        %512 = vmatprep.mubr.f32.mxu0 0.0
        %513 = vmatmul.mubr.f32.gmra.mrb[0].mxu0 %v423
        %v514 = vpop.f32.mrb[0].mxu0
        %v515 = vadd.f32 0.0, %v514
        %v516 = vpop.f32.mrb[0].mxu0
        %517 = vmatprep.mubr.f32.mxu0 0.0
        %518 = vmatmul.mubr.f32.gmra.mrb[0].mxu0 %v426
        %v519 = vpop.f32.mrb[0].mxu0
        %v520 = vadd.f32 0.0, %v519
        %v521 = vpop.f32.mrb[0].mxu0
        %522 = vmatprep.mubr.f32.mxu0 0.0
        %523 = vmatmul.mubr.f32.gmra.mrb[0].mxu0 %v429
        %v524 = vpop.f32.mrb[0].mxu0
        %v525 = vadd.f32 0.0, %v524
        %v526 = vpop.f32.mrb[0].mxu0
        %527 = vmatprep.mubr.f32.mxu0 0.0
        %528 = vmatmul.mubr.f32.gmra.mrb[0].mxu0 %v432
        %v529 = vpop.f32.mrb[0].mxu0
        %v530 = vadd.f32 0.0, %v529
        %v531 = vpop.f32.mrb[0].mxu0
        %532 = vmatprep.mubr.f32.mxu0 0.0
        %533 = vmatmul.mubr.f32.gmra.mrb[0].mxu0 %v435
        %v534 = vpop.f32.mrb[0].mxu0
        %v535 = vadd.f32 0.0, %v534
        %v536 = vpop.f32.mrb[0].mxu0
        %537 = vmatprep.mubr.f32.mxu0 0.0
        %538 = vmatmul.mubr.f32.gmra.mrb[0].mxu0 %v438
        %v539 = vpop.f32.mrb[0].mxu0
        %v540 = vadd.f32 0.0, %v539
        %v541 = vpop.f32.mrb[0].mxu0
        %542 = vmatprep.mubr.f32.mxu0 0.0
        %543 = vmatmul.mubr.f32.gmra.mrb[0].mxu0 %v441
        %v544 = vpop.f32.mrb[0].mxu0
        %v545 = vadd.f32 0.0, %v544
        %v546 = vpop.f32.mrb[0].mxu0
        %547 = vdwg.mxu0
        %v548 = vadd.f32 %v403, %v510
        %v549 = vadd.f32 %v404, %v515
        %v550 = vadd.f32 %v405, %v520
        %v551 = vadd.f32 %v406, %v525
        %v552 = vadd.f32 %v407, %v530
        %v553 = vadd.f32 %v408, %v535
        %v554 = vadd.f32 %v409, %v540
        %v555 = vadd.f32 %v410, %v545
        %556 = vst.msk [vmem:[#allocation3] sm:$0xff] %vm394, %v548
        %557 = vst.msk [vmem:[#allocation3 + $0x8] sm:$0xff] %vm394, %v549
        %558 = vst.msk [vmem:[#allocation3 + $0x10] sm:$0xff] %vm394, %v550
        %559 = vst.msk [vmem:[#allocation3 + $0x18] sm:$0xff] %vm394, %v551
        %560 = vst.msk [vmem:[#allocation3 + $0x20] sm:$0xff] %vm394, %v552
        %561 = vst.msk [vmem:[#allocation3 + $0x28] sm:$0xff] %vm394, %v553
        %562 = vst.msk [vmem:[#allocation3 + $0x30] sm:$0xff] %vm394, %v554
        %563 = vst.msk [vmem:[#allocation3 + $0x38] sm:$0xff] %vm394, %v555
        // Predicated region
        $region37: #{tpu_custom_call.1} parent=27 // pred_check
          %p564 = pneg %p219
        $region38: #{tpu_custom_call.1} parent=27 // pred_check_branch
          %566 = sbr.rel (%p564) target = $region40
        $region39: #{tpu_custom_call.1} parent=27 // pred_region
          %v567 = vld [vmem:[%s1] sm:$0xff]
          %v568 = vld [vmem:[%s1 + $0x8] sm:$0xff]
          %v569 = vld [vmem:[%s1 + $0x10] sm:$0xff]
          %v570 = vld [vmem:[%s1 + $0x18] sm:$0xff]
          %v571 = vld [vmem:[%s1 + $0x20] sm:$0xff]
          %v572 = vld [vmem:[%s1 + $0x28] sm:$0xff]
          %v573 = vld [vmem:[%s1 + $0x30] sm:$0xff]
          %v574 = vld [vmem:[%s1 + $0x38] sm:$0xff]
          %v575 = vld [vmem:[#allocation2] sm:$0xff]
          %v576 = vld [vmem:[#allocation2 + $0x8] sm:$0xff]
          %v577 = vld [vmem:[#allocation2 + $0x10] sm:$0xff]
          %v578 = vld [vmem:[#allocation2 + $0x18] sm:$0xff]
          %v579 = vld [vmem:[#allocation2 + $0x20] sm:$0xff]
          %v580 = vld [vmem:[#allocation2 + $0x28] sm:$0xff]
          %v581 = vld [vmem:[#allocation2 + $0x30] sm:$0xff]
          %v582 = vld [vmem:[#allocation2 + $0x38] sm:$0xff]
          %583 = vxpose.xlu0.b32.start [1/16] %v567, 128
          %584 = vxpose.xlu0.b32.cont [2/16] %v568, 128
          %585 = vxpose.xlu0.b32.cont [3/16] %v569, 128
          %586 = vxpose.xlu0.b32.cont [4/16] %v570, 128
          %587 = vxpose.xlu0.b32.cont [5/16] %v571, 128
          %588 = vxpose.xlu0.b32.cont [6/16] %v572, 128
          %589 = vxpose.xlu0.b32.cont [7/16] %v573, 128
          %590 = vxpose.xlu0.b32.cont [8/16] %v574, 128
          %591 = vxpose.xlu0.b32.cont [9/16] 0.0, 128
          %592 = vxpose.xlu0.b32.cont [10/16] 0.0, 128
          %593 = vxpose.xlu0.b32.cont [11/16] 0.0, 128
          %594 = vxpose.xlu0.b32.cont [12/16] 0.0, 128
          %595 = vxpose.xlu0.b32.cont [13/16] 0.0, 128
          %596 = vxpose.xlu0.b32.cont [14/16] 0.0, 128
          %597 = vxpose.xlu0.b32.cont [15/16] 0.0, 128
          %598 = vxpose.xlu0.b32.end [16/16] 0.0, 128
          %v599 = vpop.trf.xlu0
          %v600 = vpop.trf.xlu0
          %v601 = vpop.trf.xlu0
          %v602 = vpop.trf.xlu0
          %v603 = vpop.trf.xlu0
          %v604 = vpop.trf.xlu0
          %v605 = vpop.trf.xlu0
          %v606 = vpop.trf.xlu0
          %v607 = vpop.trf.xlu0
          %v608 = vpop.trf.xlu0
          %v609 = vpop.trf.xlu0
          %v610 = vpop.trf.xlu0
          %v611 = vpop.trf.xlu0
          %v612 = vpop.trf.xlu0
          %v613 = vpop.trf.xlu0
          %v614 = vpop.trf.xlu0
          %v616 = vsel %vm256, %v599, 0
          %v619 = vsel %vm256, %v600, 0
          %v622 = vsel %vm256, %v601, 0
          %v625 = vsel %vm256, %v602, 0
          %627 = vmatprep.subr.mxu0 0.0
          %628 = vmatpush1.msra.mxu0 %v575
          %629 = vmatprep.subr.mxu0 0.0
          %630 = vmatpush1.msra.mxu0 %v576
          %631 = vmatprep.subr.mxu0 0.0
          %632 = vmatpush1.msra.mxu0 %v577
          %633 = vmatprep.subr.mxu0 0.0
          %634 = vmatpush1.msra.mxu0 %v578
          %635 = vmatprep.subr.mxu0 0.0
          %636 = vmatpush1.msra.mxu0 %v579
          %637 = vmatprep.subr.mxu0 0.0
          %638 = vmatpush1.msra.mxu0 %v580
          %639 = vmatprep.subr.mxu0 0.0
          %640 = vmatpush1.msra.mxu0 %v581
          %641 = vmatprep.subr.mxu0 0.0
          %642 = vmatpush1.msra.mxu0 %v582
          %643 = vmatprep.subr.mxu0 0.0
          %644 = vmatpush1.msra.mxu0 0.0
          %645 = vmatprep.subr.mxu0 0.0
          %646 = vmatpush1.msra.mxu0 0.0
          %647 = vmatprep.subr.mxu0 0.0
          %648 = vmatpush1.msra.mxu0 0.0
          %649 = vmatprep.subr.mxu0 0.0
          %650 = vmatpush1.msra.mxu0 0.0
          %651 = vmatprep.subr.mxu0 0.0
          %652 = vmatpush1.msra.mxu0 0.0
          %653 = vmatprep.subr.mxu0 0.0
          %654 = vmatpush1.msra.mxu0 0.0
          %655 = vmatprep.subr.mxu0 0.0
          %656 = vmatpush1.msra.mxu0 0.0
          %657 = vmatprep.subr.mxu0 0.0
          %658 = vmatpush1.msra.mxu0 0.0
          %659 = vmatprep.subr.mxu0 0.0
          %660 = vmatpush1.msra.mxu0 0.0
          %661 = vmatprep.subr.mxu0 0.0
          %662 = vmatpush1.msra.mxu0 0.0
          %663 = vmatprep.subr.mxu0 0.0
          %664 = vmatpush1.msra.mxu0 0.0
          %665 = vmatprep.subr.mxu0 0.0
          %666 = vmatpush1.msra.mxu0 0.0
          %667 = vmatprep.subr.mxu0 0.0
          %668 = vmatpush1.msra.mxu0 0.0
          %669 = vmatprep.subr.mxu0 0.0
          %670 = vmatpush1.msra.mxu0 0.0
          %671 = vmatprep.subr.mxu0 0.0
          %672 = vmatpush1.msra.mxu0 0.0
          %673 = vmatprep.subr.mxu0 0.0
          %674 = vmatpush1.msra.mxu0 0.0
          %675 = vmatprep.subr.mxu0 0.0
          %676 = vmatpush1.msra.mxu0 0.0
          %677 = vmatprep.subr.mxu0 0.0
          %678 = vmatpush1.msra.mxu0 0.0
          %679 = vmatprep.subr.mxu0 0.0
          %680 = vmatpush1.msra.mxu0 0.0
          %681 = vmatprep.subr.mxu0 0.0
          %682 = vmatpush1.msra.mxu0 0.0
          %683 = vmatprep.subr.mxu0 0.0
          %684 = vmatpush1.msra.mxu0 0.0
          %685 = vmatprep.subr.mxu0 0.0
          %686 = vmatpush1.msra.mxu0 0.0
          %687 = vmatprep.subr.mxu0 0.0
          %688 = vmatpush1.msra.mxu0 0.0
          %689 = vmatprep.subr.mxu0 0.0
          %690 = vmatpush1.msra.mxu0 0.0
          %691 = vmatprep.mubr.f32.mxu0 0.0
          %692 = vmatmul.mubr.f32.gmra.mrb[0].mxu0 %v616
          %v693 = vpop.f32.mrb[0].mxu0
          %v694 = vadd.f32 0.0, %v693
          %v695 = vpop.f32.mrb[0].mxu0
          %696 = vmatprep.mubr.f32.mxu0 0.0
          %697 = vmatmul.mubr.f32.gmra.mrb[0].mxu0 %v619
          %v698 = vpop.f32.mrb[0].mxu0
          %v699 = vadd.f32 0.0, %v698
          %v700 = vpop.f32.mrb[0].mxu0
          %701 = vmatprep.mubr.f32.mxu0 0.0
          %702 = vmatmul.mubr.f32.gmra.mrb[0].mxu0 %v622
          %v703 = vpop.f32.mrb[0].mxu0
          %v704 = vadd.f32 0.0, %v703
          %v705 = vpop.f32.mrb[0].mxu0
          %706 = vmatprep.mubr.f32.mxu0 0.0
          %707 = vmatmul.mubr.f32.gmra.mrb[0].mxu0 %v625
          %v708 = vpop.f32.mrb[0].mxu0
          %v709 = vadd.f32 0.0, %v708
          %v710 = vpop.f32.mrb[0].mxu0
          %711 = vdwg.mxu0
          %v712 = vld [vmem:[#allocation3] sm:$0xff]
          %v713 = vld [vmem:[#allocation3 + $0x8] sm:$0xff]
          %v714 = vld [vmem:[#allocation3 + $0x10] sm:$0xff]
          %v715 = vld [vmem:[#allocation3 + $0x18] sm:$0xff]
          %v716 = vld [vmem:[#allocation3 + $0x20] sm:$0xff]
          %v717 = vld [vmem:[#allocation3 + $0x28] sm:$0xff]
          %v718 = vld [vmem:[#allocation3 + $0x30] sm:$0xff]
          %v719 = vld [vmem:[#allocation3 + $0x38] sm:$0xff]
          %720 = vmatprep.subr.mxu0 0.0
          %721 = vmatpush1.msra.mxu0 %v712
          %722 = vmatprep.subr.mxu0 0.0
          %723 = vmatpush1.msra.mxu0 %v713
          %724 = vmatprep.subr.mxu0 0.0
          %725 = vmatpush1.msra.mxu0 %v714
          %726 = vmatprep.subr.mxu0 0.0
          %727 = vmatpush1.msra.mxu0 %v715
          %728 = vmatprep.subr.mxu0 0.0
          %729 = vmatpush1.msra.mxu0 %v716
          %730 = vmatprep.subr.mxu0 0.0
          %731 = vmatpush1.msra.mxu0 %v717
          %732 = vmatprep.subr.mxu0 0.0
          %733 = vmatpush1.msra.mxu0 %v718
          %734 = vmatprep.subr.mxu0 0.0
          %735 = vmatpush1.msra.mxu0 %v719
          %736 = vmatprep.subr.mxu0 0.0
          %737 = vmatpush1.msra.mxu0 0.0
          %738 = vmatprep.subr.mxu0 0.0
          %739 = vmatpush1.msra.mxu0 0.0
          %740 = vmatprep.subr.mxu0 0.0
          %741 = vmatpush1.msra.mxu0 0.0
          %742 = vmatprep.subr.mxu0 0.0
          %743 = vmatpush1.msra.mxu0 0.0
          %744 = vmatprep.subr.mxu0 0.0
          %745 = vmatpush1.msra.mxu0 0.0
          %746 = vmatprep.subr.mxu0 0.0
          %747 = vmatpush1.msra.mxu0 0.0
          %748 = vmatprep.subr.mxu0 0.0
          %749 = vmatpush1.msra.mxu0 0.0
          %750 = vmatprep.subr.mxu0 0.0
          %751 = vmatpush1.msra.mxu0 0.0
          %752 = vmatprep.subr.mxu0 0.0
          %753 = vmatpush1.msra.mxu0 0.0
          %754 = vmatprep.subr.mxu0 0.0
          %755 = vmatpush1.msra.mxu0 0.0
          %756 = vmatprep.subr.mxu0 0.0
          %757 = vmatpush1.msra.mxu0 0.0
          %758 = vmatprep.subr.mxu0 0.0
          %759 = vmatpush1.msra.mxu0 0.0
          %760 = vmatprep.subr.mxu0 0.0
          %761 = vmatpush1.msra.mxu0 0.0
          %762 = vmatprep.subr.mxu0 0.0
          %763 = vmatpush1.msra.mxu0 0.0
          %764 = vmatprep.subr.mxu0 0.0
          %765 = vmatpush1.msra.mxu0 0.0
          %766 = vmatprep.subr.mxu0 0.0
          %767 = vmatpush1.msra.mxu0 0.0
          %768 = vmatprep.subr.mxu0 0.0
          %769 = vmatpush1.msra.mxu0 0.0
          %770 = vmatprep.subr.mxu0 0.0
          %771 = vmatpush1.msra.mxu0 0.0
          %772 = vmatprep.subr.mxu0 0.0
          %773 = vmatpush1.msra.mxu0 0.0
          %774 = vmatprep.subr.mxu0 0.0
          %775 = vmatpush1.msra.mxu0 0.0
          %776 = vmatprep.subr.mxu0 0.0
          %777 = vmatpush1.msra.mxu0 0.0
          %778 = vmatprep.subr.mxu0 0.0
          %779 = vmatpush1.msra.mxu0 0.0
          %780 = vmatprep.subr.mxu0 0.0
          %781 = vmatpush1.msra.mxu0 0.0
          %782 = vmatprep.subr.mxu0 0.0
          %783 = vmatpush1.msra.mxu0 0.0
          %784 = vmatprep.mubr.f32.mxu0 0.0
          %785 = vmatmul.mubr.f32.gmra.mrb[0].mxu0 %v616
          %v786 = vpop.f32.mrb[0].mxu0
          %v787 = vadd.f32 0.0, %v786
          %v788 = vpop.f32.mrb[0].mxu0
          %789 = vmatprep.mubr.f32.mxu0 0.0
          %790 = vmatmul.mubr.f32.gmra.mrb[0].mxu0 %v619
          %v791 = vpop.f32.mrb[0].mxu0
          %v792 = vadd.f32 0.0, %v791
          %v793 = vpop.f32.mrb[0].mxu0
          %794 = vmatprep.mubr.f32.mxu0 0.0
          %795 = vmatmul.mubr.f32.gmra.mrb[0].mxu0 %v622
          %v796 = vpop.f32.mrb[0].mxu0
          %v797 = vadd.f32 0.0, %v796
          %v798 = vpop.f32.mrb[0].mxu0
          %799 = vmatprep.mubr.f32.mxu0 0.0
          %800 = vmatmul.mubr.f32.gmra.mrb[0].mxu0 %v625
          %v801 = vpop.f32.mrb[0].mxu0
          %v802 = vadd.f32 0.0, %v801
          %v803 = vpop.f32.mrb[0].mxu0
          %804 = vdwg.mxu0
          %v805 = vrcp.pop 128.0
          %v806 = vmul.f32 %v694, %v805
          %v807 = vmul.f32 %v699, %v805
          %v808 = vmul.f32 %v704, %v805
          %v809 = vmul.f32 %v709, %v805
          %v810 = vmul.f32 %v787, %v805
          %v811 = vmul.f32 %v792, %v805
          %v812 = vmul.f32 %v797, %v805
          %v813 = vmul.f32 %v802, %v805
          %v814 = vmul.f32 %v806, %v806
          %v815 = vmul.f32 %v807, %v807
          %v816 = vmul.f32 %v808, %v808
          %v817 = vmul.f32 %v809, %v809
          %v818 = vsub.f32 %v810, %v814
          %v819 = vsub.f32 %v811, %v815
          %v820 = vsub.f32 %v812, %v816
          %v821 = vsub.f32 %v813, %v817
          %v822 = vmax.f32 %v818, 0.0
          %v823 = vmax.f32 %v819, 0.0
          %v824 = vmax.f32 %v820, 0.0
          %v825 = vmax.f32 %v821, 0.0
          %v826 = vadd.f32 %v822, 1e-05
          %v827 = vadd.f32 %v823, 1e-05
          %v828 = vadd.f32 %v824, 1e-05
          %v829 = vadd.f32 %v825, 1e-05
          %v830 = vrsqrt.pop %v826
          %v831 = vrsqrt.pop %v827
          %v832 = vrsqrt.pop %v828
          %v833 = vrsqrt.pop %v829
          %vm834 = vcmask 261120
          %v836 = vsel %vm834, %v567, 0
          %v839 = vsel %vm834, %v568, 0
          %v842 = vsel %vm834, %v569, 0
          %v845 = vsel %vm834, %v570, 0
          %v848 = vsel %vm834, %v571, 0
          %v851 = vsel %vm834, %v572, 0
          %v854 = vsel %vm834, %v573, 0
          %v857 = vsel %vm834, %v574, 0
          %859 = vmatprep.subr.mxu0 0.0
          %860 = vmatpush1.msra.mxu0 %v806
          %861 = vmatprep.subr.mxu0 0.0
          %862 = vmatpush1.msra.mxu0 %v807
          %863 = vmatprep.subr.mxu0 0.0
          %864 = vmatpush1.msra.mxu0 %v808
          %865 = vmatprep.subr.mxu0 0.0
          %866 = vmatpush1.msra.mxu0 %v809
          %867 = vmatprep.subr.mxu0 0.0
          %868 = vmatpush1.msra.mxu0 0.0
          %869 = vmatprep.subr.mxu0 0.0
          %870 = vmatpush1.msra.mxu0 0.0
          %871 = vmatprep.subr.mxu0 0.0
          %872 = vmatpush1.msra.mxu0 0.0
          %873 = vmatprep.subr.mxu0 0.0
          %874 = vmatpush1.msra.mxu0 0.0
          %875 = vmatprep.subr.mxu0 0.0
          %876 = vmatpush1.msra.mxu0 0.0
          %877 = vmatprep.subr.mxu0 0.0
          %878 = vmatpush1.msra.mxu0 0.0
          %879 = vmatprep.subr.mxu0 0.0
          %880 = vmatpush1.msra.mxu0 0.0
          %881 = vmatprep.subr.mxu0 0.0
          %882 = vmatpush1.msra.mxu0 0.0
          %883 = vmatprep.subr.mxu0 0.0
          %884 = vmatpush1.msra.mxu0 0.0
          %885 = vmatprep.subr.mxu0 0.0
          %886 = vmatpush1.msra.mxu0 0.0
          %887 = vmatprep.subr.mxu0 0.0
          %888 = vmatpush1.msra.mxu0 0.0
          %889 = vmatprep.subr.mxu0 0.0
          %890 = vmatpush1.msra.mxu0 0.0
          %891 = vmatprep.subr.mxu0 0.0
          %892 = vmatpush1.msra.mxu0 0.0
          %893 = vmatprep.subr.mxu0 0.0
          %894 = vmatpush1.msra.mxu0 0.0
          %895 = vmatprep.subr.mxu0 0.0
          %896 = vmatpush1.msra.mxu0 0.0
          %897 = vmatprep.subr.mxu0 0.0
          %898 = vmatpush1.msra.mxu0 0.0
          %899 = vmatprep.subr.mxu0 0.0
          %900 = vmatpush1.msra.mxu0 0.0
          %901 = vmatprep.subr.mxu0 0.0
          %902 = vmatpush1.msra.mxu0 0.0
          %903 = vmatprep.subr.mxu0 0.0
          %904 = vmatpush1.msra.mxu0 0.0
          %905 = vmatprep.subr.mxu0 0.0
          %906 = vmatpush1.msra.mxu0 0.0
          %907 = vmatprep.subr.mxu0 0.0
          %908 = vmatpush1.msra.mxu0 0.0
          %909 = vmatprep.subr.mxu0 0.0
          %910 = vmatpush1.msra.mxu0 0.0
          %911 = vmatprep.subr.mxu0 0.0
          %912 = vmatpush1.msra.mxu0 0.0
          %913 = vmatprep.subr.mxu0 0.0
          %914 = vmatpush1.msra.mxu0 0.0
          %915 = vmatprep.subr.mxu0 0.0
          %916 = vmatpush1.msra.mxu0 0.0
          %917 = vmatprep.subr.mxu0 0.0
          %918 = vmatpush1.msra.mxu0 0.0
          %919 = vmatprep.subr.mxu0 0.0
          %920 = vmatpush1.msra.mxu0 0.0
          %921 = vmatprep.subr.mxu0 0.0
          %922 = vmatpush1.msra.mxu0 0.0
          %923 = vmatprep.mubr.f32.mxu0 0.0
          %924 = vmatmul.mubr.f32.gmra.mrb[0].mxu0 %v836
          %v925 = vpop.f32.mrb[0].mxu0
          %v926 = vadd.f32 0.0, %v925
          %v927 = vpop.f32.mrb[0].mxu0
          %928 = vmatprep.mubr.f32.mxu0 0.0
          %929 = vmatmul.mubr.f32.gmra.mrb[0].mxu0 %v839
          %v930 = vpop.f32.mrb[0].mxu0
          %v931 = vadd.f32 0.0, %v930
          %v932 = vpop.f32.mrb[0].mxu0
          %933 = vmatprep.mubr.f32.mxu0 0.0
          %934 = vmatmul.mubr.f32.gmra.mrb[0].mxu0 %v842
          %v935 = vpop.f32.mrb[0].mxu0
          %v936 = vadd.f32 0.0, %v935
          %v937 = vpop.f32.mrb[0].mxu0
          %938 = vmatprep.mubr.f32.mxu0 0.0
          %939 = vmatmul.mubr.f32.gmra.mrb[0].mxu0 %v845
          %v940 = vpop.f32.mrb[0].mxu0
          %v941 = vadd.f32 0.0, %v940
          %v942 = vpop.f32.mrb[0].mxu0
          %943 = vmatprep.mubr.f32.mxu0 0.0
          %944 = vmatmul.mubr.f32.gmra.mrb[0].mxu0 %v848
          %v945 = vpop.f32.mrb[0].mxu0
          %v946 = vadd.f32 0.0, %v945
          %v947 = vpop.f32.mrb[0].mxu0
          %948 = vmatprep.mubr.f32.mxu0 0.0
          %949 = vmatmul.mubr.f32.gmra.mrb[0].mxu0 %v851
          %v950 = vpop.f32.mrb[0].mxu0
          %v951 = vadd.f32 0.0, %v950
          %v952 = vpop.f32.mrb[0].mxu0
          %953 = vmatprep.mubr.f32.mxu0 0.0
          %954 = vmatmul.mubr.f32.gmra.mrb[0].mxu0 %v854
          %v955 = vpop.f32.mrb[0].mxu0
          %v956 = vadd.f32 0.0, %v955
          %v957 = vpop.f32.mrb[0].mxu0
          %958 = vmatprep.mubr.f32.mxu0 0.0
          %959 = vmatmul.mubr.f32.gmra.mrb[0].mxu0 %v857
          %v960 = vpop.f32.mrb[0].mxu0
          %v961 = vadd.f32 0.0, %v960
          %v962 = vpop.f32.mrb[0].mxu0
          %963 = vdwg.mxu0
          %964 = vst.msk [vmem:[%s213] sm:$0xff] %vm394, %v926
          %965 = vst.msk [vmem:[%s213 + $0x8] sm:$0xff] %vm394, %v931
          %966 = vst.msk [vmem:[%s213 + $0x10] sm:$0xff] %vm394, %v936
          %967 = vst.msk [vmem:[%s213 + $0x18] sm:$0xff] %vm394, %v941
          %968 = vst.msk [vmem:[%s213 + $0x20] sm:$0xff] %vm394, %v946
          %969 = vst.msk [vmem:[%s213 + $0x28] sm:$0xff] %vm394, %v951
          %970 = vst.msk [vmem:[%s213 + $0x30] sm:$0xff] %vm394, %v956
          %971 = vst.msk [vmem:[%s213 + $0x38] sm:$0xff] %vm394, %v961
          %972 = vmatprep.subr.mxu0 0.0
          %973 = vmatpush1.msra.mxu0 %v830
          %974 = vmatprep.subr.mxu0 0.0
          %975 = vmatpush1.msra.mxu0 %v831
          %976 = vmatprep.subr.mxu0 0.0
          %977 = vmatpush1.msra.mxu0 %v832
          %978 = vmatprep.subr.mxu0 0.0
          %979 = vmatpush1.msra.mxu0 %v833
          %980 = vmatprep.subr.mxu0 0.0
          %981 = vmatpush1.msra.mxu0 0.0
          %982 = vmatprep.subr.mxu0 0.0
          %983 = vmatpush1.msra.mxu0 0.0
          %984 = vmatprep.subr.mxu0 0.0
          %985 = vmatpush1.msra.mxu0 0.0
          %986 = vmatprep.subr.mxu0 0.0
          %987 = vmatpush1.msra.mxu0 0.0
          %988 = vmatprep.subr.mxu0 0.0
          %989 = vmatpush1.msra.mxu0 0.0
          %990 = vmatprep.subr.mxu0 0.0
          %991 = vmatpush1.msra.mxu0 0.0
          %992 = vmatprep.subr.mxu0 0.0
          %993 = vmatpush1.msra.mxu0 0.0
          %994 = vmatprep.subr.mxu0 0.0
          %995 = vmatpush1.msra.mxu0 0.0
          %996 = vmatprep.subr.mxu0 0.0
          %997 = vmatpush1.msra.mxu0 0.0
          %998 = vmatprep.subr.mxu0 0.0
          %999 = vmatpush1.msra.mxu0 0.0
          %1000 = vmatprep.subr.mxu0 0.0
          %1001 = vmatpush1.msra.mxu0 0.0
          %1002 = vmatprep.subr.mxu0 0.0
          %1003 = vmatpush1.msra.mxu0 0.0
          %1004 = vmatprep.subr.mxu0 0.0
          %1005 = vmatpush1.msra.mxu0 0.0
          %1006 = vmatprep.subr.mxu0 0.0
          %1007 = vmatpush1.msra.mxu0 0.0
          %1008 = vmatprep.subr.mxu0 0.0
          %1009 = vmatpush1.msra.mxu0 0.0
          %1010 = vmatprep.subr.mxu0 0.0
          %1011 = vmatpush1.msra.mxu0 0.0
          %1012 = vmatprep.subr.mxu0 0.0
          %1013 = vmatpush1.msra.mxu0 0.0
          %1014 = vmatprep.subr.mxu0 0.0
          %1015 = vmatpush1.msra.mxu0 0.0
          %1016 = vmatprep.subr.mxu0 0.0
          %1017 = vmatpush1.msra.mxu0 0.0
          %1018 = vmatprep.subr.mxu0 0.0
          %1019 = vmatpush1.msra.mxu0 0.0
          %1020 = vmatprep.subr.mxu0 0.0
          %1021 = vmatpush1.msra.mxu0 0.0
          %1022 = vmatprep.subr.mxu0 0.0
          %1023 = vmatpush1.msra.mxu0 0.0
          %1024 = vmatprep.subr.mxu0 0.0
          %1025 = vmatpush1.msra.mxu0 0.0
          %1026 = vmatprep.subr.mxu0 0.0
          %1027 = vmatpush1.msra.mxu0 0.0
          %1028 = vmatprep.subr.mxu0 0.0
          %1029 = vmatpush1.msra.mxu0 0.0
          %1030 = vmatprep.subr.mxu0 0.0
          %1031 = vmatpush1.msra.mxu0 0.0
          %1032 = vmatprep.subr.mxu0 0.0
          %1033 = vmatpush1.msra.mxu0 0.0
          %1034 = vmatprep.subr.mxu0 0.0
          %1035 = vmatpush1.msra.mxu0 0.0
          %1036 = vmatprep.mubr.f32.mxu0 0.0
          %1037 = vmatmul.mubr.f32.gmra.mrb[0].mxu0 %v836
          %v1038 = vpop.f32.mrb[0].mxu0
          %v1039 = vadd.f32 0.0, %v1038
          %v1040 = vpop.f32.mrb[0].mxu0
          %1041 = vmatprep.mubr.f32.mxu0 0.0
          %1042 = vmatmul.mubr.f32.gmra.mrb[0].mxu0 %v839
          %v1043 = vpop.f32.mrb[0].mxu0
          %v1044 = vadd.f32 0.0, %v1043
          %v1045 = vpop.f32.mrb[0].mxu0
          %1046 = vmatprep.mubr.f32.mxu0 0.0
          %1047 = vmatmul.mubr.f32.gmra.mrb[0].mxu0 %v842
          %v1048 = vpop.f32.mrb[0].mxu0
          %v1049 = vadd.f32 0.0, %v1048
          %v1050 = vpop.f32.mrb[0].mxu0
          %1051 = vmatprep.mubr.f32.mxu0 0.0
          %1052 = vmatmul.mubr.f32.gmra.mrb[0].mxu0 %v845
          %v1053 = vpop.f32.mrb[0].mxu0
          %v1054 = vadd.f32 0.0, %v1053
          %v1055 = vpop.f32.mrb[0].mxu0
          %1056 = vmatprep.mubr.f32.mxu0 0.0
          %1057 = vmatmul.mubr.f32.gmra.mrb[0].mxu0 %v848
          %v1058 = vpop.f32.mrb[0].mxu0
          %v1059 = vadd.f32 0.0, %v1058
          %v1060 = vpop.f32.mrb[0].mxu0
          %1061 = vmatprep.mubr.f32.mxu0 0.0
          %1062 = vmatmul.mubr.f32.gmra.mrb[0].mxu0 %v851
          %v1063 = vpop.f32.mrb[0].mxu0
          %v1064 = vadd.f32 0.0, %v1063
          %v1065 = vpop.f32.mrb[0].mxu0
          %1066 = vmatprep.mubr.f32.mxu0 0.0
          %1067 = vmatmul.mubr.f32.gmra.mrb[0].mxu0 %v854
          %v1068 = vpop.f32.mrb[0].mxu0
          %v1069 = vadd.f32 0.0, %v1068
          %v1070 = vpop.f32.mrb[0].mxu0
          %1071 = vmatprep.mubr.f32.mxu0 0.0
          %1072 = vmatmul.mubr.f32.gmra.mrb[0].mxu0 %v857
          %v1073 = vpop.f32.mrb[0].mxu0
          %v1074 = vadd.f32 0.0, %v1073
          %v1075 = vpop.f32.mrb[0].mxu0
          %1076 = vdwg.mxu0
          %1077 = vst.msk [vmem:[%s218] sm:$0xff] %vm394, %v1039
          %1078 = vst.msk [vmem:[%s218 + $0x8] sm:$0xff] %vm394, %v1044
          %1079 = vst.msk [vmem:[%s218 + $0x10] sm:$0xff] %vm394, %v1049
          %1080 = vst.msk [vmem:[%s218 + $0x18] sm:$0xff] %vm394, %v1054
          %1081 = vst.msk [vmem:[%s218 + $0x20] sm:$0xff] %vm394, %v1059
          %1082 = vst.msk [vmem:[%s218 + $0x28] sm:$0xff] %vm394, %v1064
          %1083 = vst.msk [vmem:[%s218 + $0x30] sm:$0xff] %vm394, %v1069
          %1084 = vst.msk [vmem:[%s218 + $0x38] sm:$0xff] %vm394, %v1074
        $region40: #{tpu_custom_call.1} parent=27 // pred_fallthru
          _
        %p1085 = scmp.lt.s32.totalorder %s22, 1
        %s1086 = scalar_select %p1085, %s22, 1
        %s1087 = smul.addr %s1086, 8
        %s1088 = smul.addr %s1087, 8
        %s1089 = scalar_lea.vmem %s2, %s1088
        %p1090 = scmp.lt.s32.totalorder %s22, 1
        %s1091 = scalar_select %p1090, %s22, 1
        %s1092 = smul.addr %s1091, 8
        %s1093 = smul.addr %s1092, 8
        %s1094 = scalar_lea.vmem %s3, %s1093
        // Predicated region
        $region41: #{tpu_custom_call.1} parent=27 // pred_check
          %p1095 = pneg %p97
        $region42: #{tpu_custom_call.1} parent=27 // pred_check_branch
          %1097 = sbr.rel (%p1095) target = $region44
        $region43: #{tpu_custom_call.1} parent=27 // pred_region
          _
        $region44: #{tpu_custom_call.1} parent=27 // pred_fallthru
          _
        // Predicated region
        $region45: #{tpu_custom_call.1} parent=27 // pred_check
          %p1098 = pneg %p123
        $region46: #{tpu_custom_call.1} parent=27 // pred_check_branch
          %1100 = sbr.rel (%p1098) target = $region48
        $region47: #{tpu_custom_call.1} parent=27 // pred_region
          _
        $region48: #{tpu_custom_call.1} parent=27 // pred_fallthru
          _
      $region28: #{tpu_custom_call.1} parent=5 // pred_fallthru
        _
      %p1101 = scmp.le.s32.totalorder 2, %s13
      // Predicated region
      $region49: #{tpu_custom_call.1} parent=5 // pred_check
        %p1102 = pneg %p1101
      $region50: #{tpu_custom_call.1} parent=5 // pred_check_branch
        %1104 = sbr.rel (%p1102) target = $region52
      $region51: #{tpu_custom_call.1} parent=5 // pred_region
        %s1105 = ssub.s32 %s13, 2
        // Predicated region
        $region53: #{tpu_custom_call.1} parent=51 // pred_check
          %p1106 = pneg %p103
        $region54: #{tpu_custom_call.1} parent=51 // pred_check_branch
          %1108 = sbr.rel (%p1106) target = $region56
        $region55: #{tpu_custom_call.1} parent=51 // pred_region
          %p1109 = scmp.lt.s32.totalorder %s24, 1
          %s1110 = scalar_select %p1109, %s24, 1
          %s1111 = smul.addr %s1110, 8
          %s1112 = smul.addr %s1111, 8
          %s1113 = scalar_lea.vmem %s2, %s1112
        $region56: #{tpu_custom_call.1} parent=51 // pred_fallthru
          _
        // Predicated region
        $region57: #{tpu_custom_call.1} parent=51 // pred_check
          %p1114 = pneg %p129
        $region58: #{tpu_custom_call.1} parent=51 // pred_check_branch
          %1116 = sbr.rel (%p1114) target = $region60
        $region59: #{tpu_custom_call.1} parent=51 // pred_region
          %p1117 = scmp.lt.s32.totalorder %s24, 1
          %s1118 = scalar_select %p1117, %s24, 1
          %s1119 = smul.addr %s1118, 8
          %s1120 = smul.addr %s1119, 8
          %s1121 = scalar_lea.vmem %s3, %s1120
        $region60: #{tpu_custom_call.1} parent=51 // pred_fallthru
          _
      $region52: #{tpu_custom_call.1} parent=5 // pred_fallthru
        _
    $region6: #{tpu_custom_call.1} parent=1 // loop_footer
      %s17 = sadd.s32 1, %s13
    $region7: #{tpu_custom_call.1} parent=1 // loop_footer_branch
      %12 = sbr.rel target = $region3
    $region8: #{tpu_custom_call.1} parent=1 // loop_exit
      _
    %1122 = vsyncpa [#allocation5], 1
    %s1123 = scalar_lea.sflag [#allocation5], 1
    %1124 = vsyncpa %s1123, 1

</llo_original>
